<compile_context>
chip_gen: v7x
topology: tpu7x:2x2x1
jax: 0.10.0
libtpu: 0.0.40
codegen_flags: <defaults>
</compile_context>

<pallas_src>
import jax
import jax.numpy as jnp
from jax.experimental import pallas as pl
from jax.experimental.pallas import tpu as pltpu

# ----- vocabulary construction, identical to the PyTorch script -----
m = 2
sentences = ['jack like dog', 'jack like cat', 'jack like animal',
             'dog cat animal', 'banana apple cat dog like',
             'dog fish milk like', 'dog cat animal like', 'jack like apple',
             'apple like', 'jack like banana',
             'apple banana jack movie book music like', 'cat dog hate',
             'cat dog like']
s_l = ' '.join(sentences).split()
vocab = sorted(set(s_l))          # deterministic ordering (set order is not)
vocab_size = len(vocab)           # 13

TILE_N = 2048                     # lane-dense vocab tile (multiple of 128)
SUBLANE = 8                       # f32 sublane count — batch alignment


def effective_tile_n(vs, tile_n=TILE_N):
    """Biggest useful tile: requested tile, clamped to the 128-rounded vocab."""
    return min(tile_n, pl.cdiv(vs, 128) * 128)


def pad_vocab_axis(V, tile_n):
    """Pad V's vocab (lane) axis once, at parameter-creation time."""
    vs = V.shape[1]
    n_pad = pl.cdiv(vs, tile_n) * tile_n
    return jnp.pad(V, ((0, 0), (0, n_pad - vs)))


def word2vec_kernel(h_ref, v_ref, out_ref):
    """One vocab tile: out[:, tile] = h @ V[:, tile].

    h_ref   : VMEM (batch_pad, m)     f32 — pre-gathered hidden = W[idx]
    v_ref   : VMEM (m, tile_n)            — current vocab tile of V
    out_ref : VMEM (batch_pad, tile_n)    — lane-dense output tile
    """
    h = h_ref[...].astype(jnp.float32)            # (batch_pad, m)
    v = v_ref[...].astype(jnp.float32)            # (m, tile_n)
    m_dim = h.shape[1]

    if m_dim <= 8:
        # Tiny contraction (toy m = 2): two broadcast FMAs per lane on the VPU;
        # avoids MXU push/pop latency for a 2-deep systolic pass.
        acc = h[:, 0:1] * v[0:1, :]
        for k in range(1, m_dim):
            acc = acc + h[:, k:k + 1] * v[k:k + 1, :]
    else:
        # Real word2vec m (100–300): one MXU push does the whole contraction.
        acc = jnp.dot(h, v, preferred_element_type=jnp.float32)

    out_ref[...] = acc.astype(out_ref.dtype)      # unmasked lane-dense store


def word2vec_forward_padded(h, V_pad, *, tile_n, out_dtype=jnp.float32):
    """Hot path: h (batch, m) @ V_pad (m, n_pad) -> (batch, n_pad) padded output."""
    batch, m_dim = h.shape
    _, n_pad = V_pad.shape
    assert n_pad % tile_n == 0

    # Keep output stores unmasked: pad batch (sublane axis) to a multiple of 8.
    batch_pad = pl.cdiv(batch, SUBLANE) * SUBLANE
    if batch_pad != batch:
        h = jnp.pad(h, ((0, batch_pad - batch), (0, 0)))

    out_pad = pl.pallas_call(
        word2vec_kernel,
        out_shape=jax.ShapeDtypeStruct((batch_pad, n_pad), out_dtype),
        grid_spec=pltpu.PrefetchScalarGridSpec(
            num_scalar_prefetch=0,
            grid=(n_pad // tile_n,),                               # vocab tiles
            in_specs=[
                pl.BlockSpec((batch_pad, m_dim), lambda n: (0, 0)),  # h, tiny
                pl.BlockSpec((m_dim, tile_n), lambda n: (0, n)),     # V tile
            ],
            out_specs=pl.BlockSpec((batch_pad, tile_n), lambda n: (0, n)),
        ),
        compiler_params=pltpu.CompilerParams(
            # No cross-iteration scratch anymore -> vocab tiles are independent;
            # "parallel" lets v7x shard them across its 2 TensorCores.
            dimension_semantics=("parallel",),
        ),
    )(h, V_pad)

    return out_pad[:batch] if batch_pad != batch else out_pad


def word2vec_forward(idx, W, V_pad, vs, *, tile_n, out_dtype=jnp.float32):
    """output = one_hot(idx) @ W @ V, with the one-hot matmul done as a gather.

    The W[idx] gather is a tiny (batch, m) op done wrapper-side so the kernel
    never stages the full lane-padded W table in VMEM.
    """
    h = jnp.take(W, idx, axis=0)                      # (batch, m)
    out_pad = word2vec_forward_padded(h, V_pad, tile_n=tile_n,
                                      out_dtype=out_dtype)
    # Slice only to preserve the original module's (batch, vocab) shape; large
    # consumers should use the padded output / mask downstream instead.
    return out_pad[:, :vs]


def word2vec_forward_from_onehot(X, W, V_pad, vs, *, tile_n,
                                 out_dtype=jnp.float32):
    """Original nn.Module interface: X is a batch of (exactly) one-hot rows."""
    idx = jnp.argmax(X, axis=-1).astype(jnp.int32)
    return word2vec_forward(idx, W, V_pad, vs, tile_n=tile_n,
                            out_dtype=out_dtype)


if __name__ == "__main__":
    key = jax.random.PRNGKey(0)
    kW, kV, kX = jax.random.split(key, 3)

    # Parameters: same shapes/dtype as nn.Parameter(torch.randn(...)).
    W = jax.random.normal(kW, (vocab_size, m), dtype=jnp.float32)
    V = jax.random.normal(kV, (m, vocab_size), dtype=jnp.float32)

    # One-time padding of V at parameter creation (not in the per-call path).
    tile_n = effective_tile_n(vocab_size)             # 128 at toy size
    V_pad = pad_vocab_axis(V, tile_n)

    # Input: batch of center-word token indices (== one-hot rows of the trainer).
    batch = 8
    idx = jax.random.randint(kX, (batch,), 0, vocab_size, dtype=jnp.int32)

    out = word2vec_forward(idx, W, V_pad, vocab_size, tile_n=tile_n)
    jax.block_until_ready(out)

    # Cross-check against the original module math (X @ W) @ V in full f32.
    X = jax.nn.one_hot(idx, vocab_size, dtype=jnp.float32)
    ref = jnp.dot(jnp.dot(X, W, precision=jax.lax.Precision.HIGHEST), V,
                  precision=jax.lax.Precision.HIGHEST)

    assert out.shape == (batch, vocab_size)
    assert jnp.allclose(out, ref, atol=1e-4, rtol=1e-4), "mismatch vs reference"

    # One-hot interface (module-exact signature) must agree as well.
    # NOTE: argmax path assumes X is exactly one-hot (matches the trainer's use).
    out2 = word2vec_forward_from_onehot(X, W, V_pad, vocab_size, tile_n=tile_n)
    jax.block_until_ready(out2)
    assert jnp.allclose(out2, ref, atol=1e-4, rtol=1e-4), "one-hot path mismatch"

    print("KERNEL_OK")
</pallas_src>

<mosaic_0001>
module attributes {stable_mosaic.version = 11 : i64} {
  func.func @word2vec_kernel(%arg0: i32, %arg1: memref<8x2xf32, #tpu.memory_space<vmem>>, %arg2: memref<2x128xf32, #tpu.memory_space<vmem>>, %arg3: memref<8x128xf32, #tpu.memory_space<vmem>>) attributes {dimension_semantics = [#tpu.dimension_semantics<parallel>], iteration_bounds = array<i64: 1>, scalar_prefetch = 0 : i64, scratch_operands = 0 : i64, tpu.core_type = #tpu.core_type<tc>, window_params = [{pipeline_mode = #tpu.pipeline_mode<synchronous>, transform_indices = @transform_0, window_bounds = array<i64: 8, 2>}, {transform_indices = @transform_1, window_bounds = array<i64: 2, 128>}, {transform_indices = @transform_2, window_bounds = array<i64: 8, 128>}]} {
    %c0 = arith.constant 0 : index
    %c0_0 = arith.constant 0 : index
    %0 = vector.load %arg1[%c0, %c0_0] : memref<8x2xf32, #tpu.memory_space<vmem>>, vector<8x2xf32>
    %c0_1 = arith.constant 0 : index
    %c0_2 = arith.constant 0 : index
    %1 = vector.load %arg2[%c0_1, %c0_2] : memref<2x128xf32, #tpu.memory_space<vmem>>, vector<2x128xf32>
    %2 = vector.extract_strided_slice %0 {offsets = [0, 0], sizes = [8, 1], strides = [1, 1]} : vector<8x2xf32> to vector<8x1xf32>
    %3 = vector.extract_strided_slice %1 {offsets = [0, 0], sizes = [1, 128], strides = [1, 1]} : vector<2x128xf32> to vector<1x128xf32>
    %4 = vector.broadcast %2 : vector<8x1xf32> to vector<8x128xf32>
    %5 = vector.broadcast %3 : vector<1x128xf32> to vector<8x128xf32>
    %6 = arith.mulf %4, %5 : vector<8x128xf32>
    %7 = vector.extract_strided_slice %0 {offsets = [0, 1], sizes = [8, 1], strides = [1, 1]} : vector<8x2xf32> to vector<8x1xf32>
    %8 = vector.extract_strided_slice %1 {offsets = [1, 0], sizes = [1, 128], strides = [1, 1]} : vector<2x128xf32> to vector<1x128xf32>
    %9 = vector.broadcast %7 : vector<8x1xf32> to vector<8x128xf32>
    %10 = vector.broadcast %8 : vector<1x128xf32> to vector<8x128xf32>
    %11 = arith.mulf %9, %10 : vector<8x128xf32>
    %12 = arith.addf %6, %11 : vector<8x128xf32>
    %c0_3 = arith.constant 0 : index
    %c0_4 = arith.constant 0 : index
    %13 = vector.load %arg3[%c0_3, %c0_4] : memref<8x128xf32, #tpu.memory_space<vmem>>, vector<8x128xf32>
    tpu.vector_store %arg3[%c0_3, %c0_4], %12 {strides = array<i32>} : memref<8x128xf32, #tpu.memory_space<vmem>>, vector<8x128xf32>,
    return
  }
  func.func @transform_0(%arg0: i32) -> (i32, i32) {
    %c0_i32 = arith.constant 0 : i32
    %c0_i32_0 = arith.constant 0 : i32
    %c0_i32_1 = arith.constant 0 : i32
    return %c0_i32, %c0_i32_0 : i32, i32
  }
  func.func @transform_1(%arg0: i32) -> (i32, i32) {
    %c0_i32 = arith.constant 0 : i32
    %c0_i32_0 = arith.constant 0 : i32
    return %c0_i32, %arg0 : i32, i32
  }
  func.func @transform_2(%arg0: i32) -> (i32, i32) {
    %c0_i32 = arith.constant 0 : i32
    %c0_i32_0 = arith.constant 0 : i32
    return %c0_i32, %arg0 : i32, i32
  }
}

</mosaic_0001>

<llo_original>
// kernel: tpu_custom_call.1
$region0: #{tpu_custom_call.1}
  #allocation0 [shape = 'u32[]', space=smem, size = 0x4, offset = 0x4, fixed_abs, tag = 'smem constant byte address 0x4 - core index']
  #allocation1 [shape = 'u32[144,128]{1,0:T(1,128)}', space=vmem, size = 0x12000, scoped, tag = 'internal scratch']
  %s0 = inlined_call_operand.vmem [shape: f32[8,2], index: 0, kind: input, shape index: {}]
  %s1 = inlined_call_operand.vmem [shape: f32[2,128], index: 1, kind: input, shape index: {}]
  %s2 = inlined_call_operand.hbm [shape: f32[8,128], index: 2, kind: output, shape index: {}]
  %s3 = sld [smem:[#allocation0]]
  $region18: #{tpu_custom_call.1} parent=0
    _
  %s5 = ssub.s32 1, %s3
  %s6 = scalar_select 0, %s5, %s3
  $region1: #{tpu_custom_call.1} parent=0
    #allocation2 [shape = 'u8[4096]{0}', space=vmem, size = 0x1000, scoped, tag = 'output window, operand 0, single buffered']
    #allocation3 [shape = 's32[1]{0}', space=sflag, size = 0x4, scoped, tag = 'scoped memory for tpu_custom_call.1']
    %7 = vsyncpa [#allocation3], 0
    // Predicated region
    $region2: #{tpu_custom_call.1} parent=1 // pred_check
      _
    $region3: #{tpu_custom_call.1} parent=1 // pred_check_branch
      %9 = sbr.rel (0) target = $region5
    $region4: #{tpu_custom_call.1} parent=1 // pred_region
      _
    $region5: #{tpu_custom_call.1} parent=1 // pred_fallthru
      _
    // Predicated region
    $region6: #{tpu_custom_call.1} parent=1 // pred_check
      _
    $region7: #{tpu_custom_call.1} parent=1 // pred_check_branch
      %11 = sbr.rel (0) target = $region9
    $region8: #{tpu_custom_call.1} parent=1 // pred_region
      _
    $region9: #{tpu_custom_call.1} parent=1 // pred_fallthru
      _
    %v12 = vld [vmem:[%s0] sm:$0xff]
    %v13 = vld [vmem:[%s1] sm:$0x3]
    %15 = vset.pattern.permute.xlu0 0
    %16 = vperm.xlu0 %15, %v12
    %v17 = vpop.permute.xlu0 %16
    %v19 = vlaneseq
    %v20 = vshrl.u32 %v19, 7
    %v21 = vsub.s32 0, %v20
    %v22 = vrot.slane %v13, %v21
    %v23 = vmul.f32 %v17, %v22
    %24 = vset.pattern.permute.xlu0 1
    %25 = vperm.xlu0 %24, %v12
    %v26 = vpop.permute.xlu0 %25
    %v28 = vlaneseq
    %v29 = vshrl.u32 %v28, 7
    %v30 = vsub.s32 1, %v29
    %v31 = vrot.slane %v13, %v30
    %v32 = vmul.f32 %v26, %v31
    %v33 = vadd.f32 %v23, %v32
    %34 = vst [vmem:[#allocation2] sm:$0xff] %v33
    // Predicated region
    $region10: #{tpu_custom_call.1} parent=1 // pred_check
      _
    $region11: #{tpu_custom_call.1} parent=1 // pred_check_branch
      %36 = sbr.rel (0) target = $region13
    $region12: #{tpu_custom_call.1} parent=1 // pred_region
      %s38 = ssub.s32 128, 128
      %39 = vsyncadd [#allocation3], %s38
      %s41 = sshll.u32 [#allocation2], 4
      %s42 = int_to_ptr.vmem [resolvable:$true] %s41
      %44 = dma.vmem_to_hbm [thread:$0]  %s42, 128, %s2, [#allocation3]
    $region13: #{tpu_custom_call.1} parent=1 // pred_fallthru
      _
    // Predicated region
    $region14: #{tpu_custom_call.1} parent=1 // pred_check
      _
    $region15: #{tpu_custom_call.1} parent=1 // pred_check_branch
      %46 = sbr.rel (0) target = $region17
    $region16: #{tpu_custom_call.1} parent=1 // pred_region
      %47 = dma.done [#allocation3], 128
    $region17: #{tpu_custom_call.1} parent=1 // pred_fallthru
      _
    %48 = vsyncpa [#allocation3], 1

</llo_original>
